<compile_context>
chip_gen: v7x
topology: tpu7x:2x2x1
jax: 0.10.0
libtpu: 0.0.40
codegen_flags: <defaults>
</compile_context>

<pallas_src>
import jax
import jax.numpy as jnp
import numpy as np
from jax.experimental import pallas as pl
from jax.experimental.pallas import tpu as pltpu


def _round_up(x, m):
    return ((x + m - 1) // m) * m


def _make_cb_loss_kernel(num_rows, num_classes, epsilon, gamma, loss_type):
    eps = float(epsilon)
    gamma = float(gamma)
    nc = int(num_classes)
    n_rows = int(num_rows)          # real (unpadded) row count, for masking
    t_on = (1.0 - eps) + eps / nc   # smoothed target at the label column
    t_off = eps / nc                # smoothed target elsewhere

    def kernel(logits_ref, labels_ref, sw_ref, o_ref):
        T, C = logits_ref.shape
        row0 = pl.program_id(0) * T
        row_id = row0 + jax.lax.broadcasted_iota(jnp.int32, (T, 1), 0)
        row_valid = row_id < n_rows                      # (T, 1) bool

        # Native-dtype load, cast to f32, then neutralize OOB / padded rows.
        # (-1e9 applied in f32 is safe for any input dtype, incl. fp16/bf16.)
        x = logits_ref[...].astype(jnp.float32)          # (T, C)
        x = jnp.where(row_valid, x, jnp.float32(-1e9))
        lab = labels_ref[...]                            # (T, 1) int32 (garbage rows OK)
        sw = jnp.where(row_valid, sw_ref[...], 0.0)      # (T, 1) f32 per-row weight

        col = jax.lax.broadcasted_iota(jnp.int32, (T, C), 1)
        # label-smoothed targets as a single select (no extra (T,C) temps)
        t = jnp.where(col == lab, jnp.float32(t_on), jnp.float32(t_off))

        if loss_type == "softmax":
            # softmax over classes, then weighted binary cross entropy.
            m = jnp.max(x, axis=1, keepdims=True)
            e = jnp.exp(x - m)
            s = jnp.sum(e, axis=1, keepdims=True)
            log_s = jnp.log(s)
            # F.binary_cross_entropy clamps its log terms at -100.
            log_p = jnp.maximum((x - m) - log_s, -100.0)         # log softmax
            # log(1 - pred) = log((s - e)/s); avoids the (T,C) divide entirely.
            log_1mp = jnp.maximum(jnp.log(s - e) - log_s, -100.0)
            weighted = sw * -(t * log_p + (1.0 - t) * log_1mp)
        elif loss_type == "sigmoid":
            # BCE-with-logits, pos_weight = per-row class-balanced weight.
            sp = jnp.maximum(-x, 0.0) + jnp.log1p(jnp.exp(-jnp.abs(x)))  # softplus(-x)
            # -(pw*t*log_sig + (1-t)*log_1msig) with log_sig=-sp, log_1msig=-x-sp
            weighted = (sw * t) * sp + (1.0 - t) * (x + sp)
        else:  # focal
            sp = jnp.maximum(-x, 0.0) + jnp.log1p(jnp.exp(-jnp.abs(x)))  # log(1+e^-x)
            # BCEWithLogits(none) = max(x,0) - x*t + log1p(e^-|x|) = x*(1-t) + sp
            bce = x * (1.0 - t) + sp
            if gamma == 0.0:
                modulated = bce
            else:
                modulated = jnp.exp(-gamma * (t * x + sp)) * bce
            weighted = sw * modulated

        # lane-dense per-tile partial sums; final scalar reduce in the wrapper
        o_ref[...] = jnp.sum(weighted, axis=0, keepdims=True).reshape(1, 1, C)

    return kernel


def _vmem_capacity_bytes():
    # Generation-aware VMEM capacity; conservative (v7x-sized) fallback.
    try:
        return int(pltpu.get_tpu_info().vmem_capacity_bytes)
    except Exception:
        return 64 << 20


def cb_loss(logits, labels, beta, gamma, epsilon=0.1, loss_type="softmax",
            tile_n=None):
    """Pallas implementation of CB_loss.forward."""
    if loss_type not in ("softmax", "sigmoid", "focal"):
        raise ValueError(f"unknown loss_type: {loss_type}")
    N, C = logits.shape
    labels = labels.astype(jnp.int32)

    # ---- class-balanced class weights (tiny, plain JAX, batch histogram) ----
    counts = jnp.bincount(labels, length=C).astype(jnp.float32)
    effective_num = 1.0 - jnp.power(jnp.float32(beta), counts)
    w = (1.0 - beta) / (effective_num + 1e-8)
    w = w / jnp.sum(w) * C                                           # (C,)
    # per-row weight: sum_c w_c * t_rc = (1-eps)*w[label] + (eps/C)*sum(w)
    sw = (1.0 - epsilon) * jnp.take(w, labels) + (epsilon / C) * jnp.sum(w)

    # ---- VMEM-budget-driven tile size (generation aware) ----
    in_bytes = jnp.dtype(logits.dtype).itemsize
    pack = max(8, 32 // max(in_bytes, 1))       # sublane pack: 8 f32 / 16 bf16 / 32 i8
    vmem_cap = _vmem_capacity_bytes()
    budget = min(int(vmem_cap * 0.35), 48 << 20)          # blocks + f32 temps
    vmem_limit = max(32 << 20, min(int(vmem_cap * 0.70), 100 << 20))

    C_lane = _round_up(C, 128)                  # lane-padded width actually held in VMEM
    # double-buffered native logits block + ~6 f32 temps + labels/sw blocks
    per_row = 2 * C_lane * in_bytes + 6 * C_lane * 4 + 2 * 2 * 128 * 4
    if tile_n is None:
        t = max(pack, (budget // per_row) // pack * pack)
        t = min(t, 4096)
        t = min(t, _round_up(N, pack))
        if t >= N and N > pack:
            # keep >= 2 grid steps so the parallel axis splits across v7x cores
            t = _round_up(-(-N // 2), pack)
        tile_n = int(t)
    else:
        tile_n = _round_up(int(tile_n), pack)

    labels_2d = labels.reshape(-1, 1)
    sw_2d = sw.astype(jnp.float32).reshape(-1, 1)

    # Tiny-batch edge case only (N < one tile): pad rows so no block exceeds the
    # array. Everything else relies on in-kernel row masking (no logits pad).
    if N < tile_n:
        pad = tile_n - N
        logits = jnp.pad(logits, ((0, pad), (0, 0)))
        labels_2d = jnp.pad(labels_2d, ((0, pad), (0, 0)))
        sw_2d = jnp.pad(sw_2d, ((0, pad), (0, 0)))
    n_rows_arr = logits.shape[0]
    G = (n_rows_arr + tile_n - 1) // tile_n

    kernel = _make_cb_loss_kernel(N, C, epsilon, gamma, loss_type)
    partials = pl.pallas_call(
        kernel,
        out_shape=jax.ShapeDtypeStruct((G, 1, C), jnp.float32),
        grid=(G,),
        in_specs=[
            pl.BlockSpec((tile_n, C), lambda i: (i, 0)),  # logits, native dtype
            pl.BlockSpec((tile_n, 1), lambda i: (i, 0)),  # labels
            pl.BlockSpec((tile_n, 1), lambda i: (i, 0)),  # per-row weights
        ],
        out_specs=pl.BlockSpec((1, 1, C), lambda i: (i, 0, 0)),
        compiler_params=pltpu.CompilerParams(
            dimension_semantics=("parallel",),
            vmem_limit_bytes=vmem_limit),
    )(logits, labels_2d, sw_2d)

    total = jnp.sum(partials)
    if loss_type == "focal":
        # sum of smoothed targets over the real (N, C) region
        denom = jnp.float32(N) * jnp.float32((1.0 - epsilon) + C * (epsilon / C))
    else:
        denom = jnp.float32(N * C)
    return total / denom


def cb_loss_ref(logits, labels, beta, gamma, epsilon, loss_type="softmax"):
    """Pure-JAX mirror of the PyTorch CB_loss.forward."""
    N, C = logits.shape
    x = logits.astype(jnp.float32)
    one_hot = jax.nn.one_hot(labels, C, dtype=jnp.float32)
    samples = one_hot.sum(0)
    eff = 1.0 - jnp.power(jnp.float32(beta), samples)
    w = (1.0 - beta) / (eff + 1e-8)
    w = w / jnp.sum(w) * C
    t = (1.0 - epsilon) * one_hot + epsilon / C
    weights = jnp.broadcast_to((w[None, :] * t).sum(1, keepdims=True), (N, C))
    if loss_type == "softmax":
        pred = jax.nn.softmax(x, axis=1)
        per = -(t * jnp.maximum(jnp.log(pred), -100.0)
                + (1.0 - t) * jnp.maximum(jnp.log(1.0 - pred), -100.0))
        return (weights * per).sum() / (N * C)
    if loss_type == "sigmoid":
        per = -(weights * t * jax.nn.log_sigmoid(x)
                + (1.0 - t) * jax.nn.log_sigmoid(-x))
        return per.sum() / (N * C)
    # focal
    sp = jnp.maximum(-x, 0.0) + jnp.log1p(jnp.exp(-jnp.abs(x)))
    bce = jnp.maximum(x, 0.0) - x * t + jnp.log1p(jnp.exp(-jnp.abs(x)))
    mod = 1.0 if gamma == 0.0 else jnp.exp(-gamma * t * x - gamma * sp)
    return (weights * mod * bce).sum() / t.sum()


if __name__ == "__main__":
    beta, gamma, epsilon = 0.9999, 2.0, 0.1  # module __init__ hyper-params

    key = jax.random.PRNGKey(0)
    # (N, C, dtype, tile_n): exercises aligned f32, non-aligned rows with an
    # explicit tile (partial last block + row masking), and a bf16 multi-tile
    # case that hits the 16-row sublane-pack rounding.
    cases = ((16, 10, jnp.float32, None),
             (13, 7, jnp.float32, 8),
             (100, 33, jnp.bfloat16, None))
    for (N, C, dt, tile) in cases:
        key, k1, k2 = jax.random.split(key, 3)
        logits = jax.random.normal(k1, (N, C), dtype=jnp.float32).astype(dt)
        labels = jax.random.randint(k2, (N,), 0, C, dtype=jnp.int32)
        for lt in ("softmax", "sigmoid", "focal"):
            out = jax.block_until_ready(
                cb_loss(logits, labels, beta, gamma, epsilon, loss_type=lt,
                        tile_n=tile))
            ref = jax.block_until_ready(
                cb_loss_ref(logits, labels, beta, gamma, epsilon, loss_type=lt))
            out_np, ref_np = np.asarray(out), np.asarray(ref)
            assert np.isfinite(out_np), (N, C, lt, out_np)
            np.testing.assert_allclose(out_np, ref_np, rtol=2e-4, atol=1e-5,
                                       err_msg=f"N={N} C={C} dt={dt} loss={lt}")
    print("KERNEL_OK")
</pallas_src>

<mosaic_0001>
module attributes {stable_mosaic.version = 11 : i64} {
  func.func @kernel(%arg0: i32, %arg1: memref<8x10xf32, #tpu.memory_space<vmem>>, %arg2: memref<8x1xi32, #tpu.memory_space<vmem>>, %arg3: memref<8x1xf32, #tpu.memory_space<vmem>>, %arg4: memref<1x1x10xf32, #tpu.memory_space<vmem>>) attributes {dimension_semantics = [#tpu.dimension_semantics<parallel>], iteration_bounds = array<i64: 2>, scalar_prefetch = 0 : i64, scratch_operands = 0 : i64, tpu.core_type = #tpu.core_type<tc>, window_params = [{transform_indices = @transform_0, window_bounds = array<i64: 8, 10>}, {transform_indices = @transform_1, window_bounds = array<i64: 8, 1>}, {transform_indices = @transform_2, window_bounds = array<i64: 8, 1>}, {transform_indices = @transform_3, window_bounds = array<i64: 1, 1, 10>}]} {
    %c8_i32 = arith.constant 8 : i32
    %0 = arith.muli %arg0, %c8_i32 : i32
    %1 = tpu.iota {dimensions = array<i32: 0>} : vector<8x1xi32>
    %2 = vector.broadcast %0 : i32 to vector<8x1xi32>
    %3 = arith.addi %2, %1 : vector<8x1xi32>
    %c16_i32 = arith.constant 16 : i32
    %4 = vector.broadcast %c16_i32 : i32 to vector<8x1xi32>
    %5 = arith.cmpi slt, %3, %4 : vector<8x1xi32>
    %c0 = arith.constant 0 : index
    %c0_0 = arith.constant 0 : index
    %6 = vector.load %arg1[%c0, %c0_0] : memref<8x10xf32, #tpu.memory_space<vmem>>, vector<8x10xf32>
    %cst = arith.constant -1.000000e+09 : f32
    %7 = vector.shape_cast %5 : vector<8x1xi1> to vector<8x1xi1>
    %8 = vector.broadcast %7 : vector<8x1xi1> to vector<8x10xi1>
    %9 = vector.broadcast %cst : f32 to vector<8x10xf32>
    %10 = arith.select %8, %6, %9 : vector<8x10xi1>, vector<8x10xf32>
    %c0_1 = arith.constant 0 : index
    %c0_2 = arith.constant 0 : index
    %11 = vector.load %arg2[%c0_1, %c0_2] : memref<8x1xi32, #tpu.memory_space<vmem>>, vector<8x1xi32>
    %c0_3 = arith.constant 0 : index
    %c0_4 = arith.constant 0 : index
    %12 = vector.load %arg3[%c0_3, %c0_4] : memref<8x1xf32, #tpu.memory_space<vmem>>, vector<8x1xf32>
    %cst_5 = arith.constant 0.000000e+00 : f32
    %13 = vector.broadcast %cst_5 : f32 to vector<8x1xf32>
    %14 = arith.select %5, %12, %13 : vector<8x1xi1>, vector<8x1xf32>
    %15 = tpu.iota {dimensions = array<i32: 1>} : vector<8x10xi32>
    %16 = vector.broadcast %11 : vector<8x1xi32> to vector<8x10xi32>
    %17 = arith.cmpi eq, %15, %16 : vector<8x10xi32>
    %cst_6 = arith.constant 9.100000e-01 : f32
    %cst_7 = arith.constant 0.00999999977 : f32
    %18 = vector.broadcast %cst_6 : f32 to vector<8x10xf32>
    %19 = vector.broadcast %cst_7 : f32 to vector<8x10xf32>
    %20 = arith.select %17, %18, %19 : vector<8x10xi1>, vector<8x10xf32>
    %cst_8 = arith.constant dense<0xFF800000> : vector<8xf32>
    %21 = vector.multi_reduction <maximumf>, %10, %cst_8 [1] : vector<8x10xf32> to vector<8xf32>
    %22 = vector.shape_cast %21 : vector<8xf32> to vector<8x1xf32>
    %23 = vector.broadcast %22 : vector<8x1xf32> to vector<8x10xf32>
    %24 = arith.subf %10, %23 : vector<8x10xf32>
    %25 = math.exp %24 : vector<8x10xf32>
    %cst_9 = arith.constant dense<0.000000e+00> : vector<8xf32>
    %26 = vector.multi_reduction <add>, %25, %cst_9 [1] : vector<8x10xf32> to vector<8xf32>
    %27 = vector.shape_cast %26 : vector<8xf32> to vector<8x1xf32>
    %28 = math.log %27 : vector<8x1xf32>
    %29 = vector.broadcast %22 : vector<8x1xf32> to vector<8x10xf32>
    %30 = arith.subf %10, %29 : vector<8x10xf32>
    %31 = vector.broadcast %28 : vector<8x1xf32> to vector<8x10xf32>
    %32 = arith.subf %30, %31 : vector<8x10xf32>
    %cst_10 = arith.constant -1.000000e+02 : f32
    %33 = vector.broadcast %cst_10 : f32 to vector<8x10xf32>
    %34 = arith.maximumf %32, %33 : vector<8x10xf32>
    %35 = vector.broadcast %27 : vector<8x1xf32> to vector<8x10xf32>
    %36 = arith.subf %35, %25 : vector<8x10xf32>
    %37 = math.log %36 : vector<8x10xf32>
    %38 = vector.broadcast %28 : vector<8x1xf32> to vector<8x10xf32>
    %39 = arith.subf %37, %38 : vector<8x10xf32>
    %cst_11 = arith.constant -1.000000e+02 : f32
    %40 = vector.broadcast %cst_11 : f32 to vector<8x10xf32>
    %41 = arith.maximumf %39, %40 : vector<8x10xf32>
    %42 = arith.mulf %20, %34 : vector<8x10xf32>
    %cst_12 = arith.constant 1.000000e+00 : f32
    %43 = vector.broadcast %cst_12 : f32 to vector<8x10xf32>
    %44 = arith.subf %43, %20 : vector<8x10xf32>
    %45 = arith.mulf %44, %41 : vector<8x10xf32>
    %46 = arith.addf %42, %45 : vector<8x10xf32>
    %cst_13 = arith.constant 0.000000e+00 : f32
    %47 = vector.broadcast %cst_13 : f32 to vector<8x10xf32>
    %48 = arith.subf %47, %46 : vector<8x10xf32>
    %49 = vector.broadcast %14 : vector<8x1xf32> to vector<8x10xf32>
    %50 = arith.mulf %49, %48 : vector<8x10xf32>
    %cst_14 = arith.constant dense<0.000000e+00> : vector<10xf32>
    %51 = vector.multi_reduction <add>, %50, %cst_14 [0] : vector<8x10xf32> to vector<10xf32>
    %52 = vector.shape_cast %51 : vector<10xf32> to vector<1x10xf32>
    %53 = vector.shape_cast %52 : vector<1x10xf32> to vector<1x1x10xf32>
    %c0_15 = arith.constant 0 : index
    %c0_16 = arith.constant 0 : index
    %c0_17 = arith.constant 0 : index
    %54 = vector.load %arg4[%c0_15, %c0_16, %c0_17] : memref<1x1x10xf32, #tpu.memory_space<vmem>>, vector<1x1x10xf32>
    tpu.vector_store %arg4[%c0_15, %c0_16, %c0_17], %53 {strides = array<i32>} : memref<1x1x10xf32, #tpu.memory_space<vmem>>, vector<1x1x10xf32>,
    return
  }
  func.func @transform_0(%arg0: i32) -> (i32, i32) {
    %c0_i32 = arith.constant 0 : i32
    %c0_i32_0 = arith.constant 0 : i32
    return %arg0, %c0_i32 : i32, i32
  }
  func.func @transform_1(%arg0: i32) -> (i32, i32) {
    %c0_i32 = arith.constant 0 : i32
    %c0_i32_0 = arith.constant 0 : i32
    return %arg0, %c0_i32 : i32, i32
  }
  func.func @transform_2(%arg0: i32) -> (i32, i32) {
    %c0_i32 = arith.constant 0 : i32
    %c0_i32_0 = arith.constant 0 : i32
    return %arg0, %c0_i32 : i32, i32
  }
  func.func @transform_3(%arg0: i32) -> (i32, i32, i32) {
    %c0_i32 = arith.constant 0 : i32
    %c0_i32_0 = arith.constant 0 : i32
    %c0_i32_1 = arith.constant 0 : i32
    return %arg0, %c0_i32, %c0_i32_0 : i32, i32, i32
  }
}

</mosaic_0001>

<llo_original>
// kernel: tpu_custom_call.1
$region0: #{tpu_custom_call.1}
  #allocation0 [shape = 'u32[]', space=smem, size = 0x4, offset = 0x4, fixed_abs, tag = 'smem constant byte address 0x4 - core index']
  #allocation1 [shape = 'u32[144,128]{1,0:T(1,128)}', space=vmem, size = 0x12000, scoped, tag = 'internal scratch']
  %s0 = inlined_call_operand.vmem [shape: f32[16,10], index: 0, kind: input, shape index: {}]
  %s1 = inlined_call_operand.vmem [shape: s32[16,1], index: 1, kind: input, shape index: {}]
  %s2 = inlined_call_operand.vmem [shape: f32[16,1], index: 2, kind: input, shape index: {}]
  %s3 = inlined_call_operand.hbm [shape: f32[2,1,10], index: 3, kind: output, shape index: {}]
  %s4 = sld [smem:[#allocation0]]
  $region45: #{tpu_custom_call.1} parent=0
    _
  %s6 = ssub.s32 1, %s4
  %s7 = scalar_select 0, %s6, %s4
  $region1: #{tpu_custom_call.1} parent=0
    #allocation2 [shape = 'u8[1024]{0}', space=vmem, size = 0x400, scoped, tag = 'output window, operand 0']
    #allocation3 [shape = 's32[2]{0}', space=sflag, size = 0x8, scoped, tag = 'scoped memory for tpu_custom_call.1']
    %8 = vsyncpa [#allocation3], 0
    %s9 = scalar_lea.sflag [#allocation3], 1
    %10 = vsyncpa %s9, 0
    loop: start=0, step=1, limit=4
    $region2: #{tpu_custom_call.1} parent=1 // loop_pre_header
      _
    $region3: #{tpu_custom_call.1} parent=1 // loop_header
      %s12 = sphi 0, %s16
      %p13 = scmp.ge.s32.totalorder %s12, 4
      %s22 = sphi 0, %s24
      %s25 = sphi 0, %s22
      %s26 = sphi 0, %s25
      %s42 = sphi 0, %s26
      %s48 = sphi 0, %s50
      %s51 = sphi 0, %s48
      %s52 = sphi 0, %s51
      %s68 = sphi 0, %s52
      %s74 = sphi 0, %s76
      %s77 = sphi 0, %s74
      %s78 = sphi 0, %s77
      %s94 = sphi 0, %s78
      %s100 = sphi 0, %s102
      %s103 = sphi 0, %s100
      %s104 = sphi 0, %s103
      %s120 = sphi 0, %s104
    $region4: #{tpu_custom_call.1} parent=1 // loop_header_branch
      %15 = sbr.rel (%p13) target = $region8
    $region5: #{tpu_custom_call.1} parent=1 // loop_body
      %s17 = ssub.s32 %s12, 1
      %s18 = ssub.s32 %s12, 2
      %s19 = sadd.s32 %s12, 1
      %s20 = ssub.s32 %s12, %s19
      %p21 = scmp.eq.s32.totalorder %s20, 0
      %s23 = sadd.s32 %s22, 1
      %s24 = scalar_select %p21, %s22, %s23
      %p27 = pneg %p21
      %p28 = scmp.eq.s32.totalorder %s12, 1
      %p29 = por %p27, %p28
      %p30 = scmp.ne.s32.totalorder %s22, %s25
      %p31 = scmp.eq.s32.totalorder %s12, 0
      %p32 = por %p30, %p31
      %p33 = scmp.ne.s32.totalorder %s22, %s25
      %p34 = scmp.eq.s32.totalorder %s17, 1
      %p35 = por %p33, %p34
      %p36 = scmp.ne.s32.totalorder %s25, %s26
      %p37 = scmp.eq.s32.totalorder %s17, 0
      %p38 = por %p36, %p37
      %p39 = scmp.ne.s32.totalorder %s25, %s26
      %p40 = scmp.eq.s32.totalorder %s18, 1
      %p41 = por %p39, %p40
      %p43 = scmp.ne.s32.totalorder %s26, %s42
      %p44 = scmp.eq.s32.totalorder %s18, 0
      %p45 = por %p43, %p44
      %s46 = ssub.s32 %s12, %s19
      %p47 = scmp.eq.s32.totalorder %s46, 0
      %s49 = sadd.s32 %s48, 1
      %s50 = scalar_select %p47, %s48, %s49
      %p53 = pneg %p47
      %p54 = scmp.eq.s32.totalorder %s12, 1
      %p55 = por %p53, %p54
      %p56 = scmp.ne.s32.totalorder %s48, %s51
      %p57 = scmp.eq.s32.totalorder %s12, 0
      %p58 = por %p56, %p57
      %p59 = scmp.ne.s32.totalorder %s48, %s51
      %p60 = scmp.eq.s32.totalorder %s17, 1
      %p61 = por %p59, %p60
      %p62 = scmp.ne.s32.totalorder %s51, %s52
      %p63 = scmp.eq.s32.totalorder %s17, 0
      %p64 = por %p62, %p63
      %p65 = scmp.ne.s32.totalorder %s51, %s52
      %p66 = scmp.eq.s32.totalorder %s18, 1
      %p67 = por %p65, %p66
      %p69 = scmp.ne.s32.totalorder %s52, %s68
      %p70 = scmp.eq.s32.totalorder %s18, 0
      %p71 = por %p69, %p70
      %s72 = ssub.s32 %s12, %s19
      %p73 = scmp.eq.s32.totalorder %s72, 0
      %s75 = sadd.s32 %s74, 1
      %s76 = scalar_select %p73, %s74, %s75
      %p79 = pneg %p73
      %p80 = scmp.eq.s32.totalorder %s12, 1
      %p81 = por %p79, %p80
      %p82 = scmp.ne.s32.totalorder %s74, %s77
      %p83 = scmp.eq.s32.totalorder %s12, 0
      %p84 = por %p82, %p83
      %p85 = scmp.ne.s32.totalorder %s74, %s77
      %p86 = scmp.eq.s32.totalorder %s17, 1
      %p87 = por %p85, %p86
      %p88 = scmp.ne.s32.totalorder %s77, %s78
      %p89 = scmp.eq.s32.totalorder %s17, 0
      %p90 = por %p88, %p89
      %p91 = scmp.ne.s32.totalorder %s77, %s78
      %p92 = scmp.eq.s32.totalorder %s18, 1
      %p93 = por %p91, %p92
      %p95 = scmp.ne.s32.totalorder %s78, %s94
      %p96 = scmp.eq.s32.totalorder %s18, 0
      %p97 = por %p95, %p96
      %s98 = ssub.s32 %s12, %s19
      %p99 = scmp.eq.s32.totalorder %s98, 0
      %s101 = sadd.s32 %s100, 1
      %s102 = scalar_select %p99, %s100, %s101
      %p105 = pneg %p99
      %p106 = scmp.eq.s32.totalorder %s12, 1
      %p107 = por %p105, %p106
      %p108 = scmp.ne.s32.totalorder %s100, %s103
      %p109 = scmp.eq.s32.totalorder %s12, 0
      %p110 = por %p108, %p109
      %p111 = scmp.ne.s32.totalorder %s100, %s103
      %p112 = scmp.eq.s32.totalorder %s17, 1
      %p113 = por %p111, %p112
      %p114 = scmp.ne.s32.totalorder %s103, %s104
      %p115 = scmp.eq.s32.totalorder %s17, 0
      %p116 = por %p114, %p115
      %p117 = scmp.ne.s32.totalorder %s103, %s104
      %p118 = scmp.eq.s32.totalorder %s18, 1
      %p119 = por %p117, %p118
      %p121 = scmp.ne.s32.totalorder %s104, %s120
      %p122 = scmp.eq.s32.totalorder %s18, 0
      %p123 = por %p121, %p122
      %p124 = scmp.le.s32.totalorder 1, %s12
      %p125 = scmp.lt.s32.totalorder %s12, 3
      %p126 = pnand %p124, %p125
      %p127 = pneg %p126
      // Predicated region
      $region9: #{tpu_custom_call.1} parent=5 // pred_check
        _
      $region10: #{tpu_custom_call.1} parent=5 // pred_check_branch
        %129 = sbr.rel (%p126) target = $region12
      $region11: #{tpu_custom_call.1} parent=5 // pred_region
        %s130 = ssub.s32 %s12, 1
      $region12: #{tpu_custom_call.1} parent=5 // pred_fallthru
        _
      %p131 = scmp.lt.s32.totalorder %s12, 2
      // Predicated region
      $region13: #{tpu_custom_call.1} parent=5 // pred_check
        %p132 = pneg %p131
      $region14: #{tpu_custom_call.1} parent=5 // pred_check_branch
        %134 = sbr.rel (%p132) target = $region16
      $region15: #{tpu_custom_call.1} parent=5 // pred_region
        // Predicated region
        $region17: #{tpu_custom_call.1} parent=15 // pred_check
          %p135 = pneg %p32
        $region18: #{tpu_custom_call.1} parent=15 // pred_check_branch
          %137 = sbr.rel (%p135) target = $region20
        $region19: #{tpu_custom_call.1} parent=15 // pred_region
          %p138 = scmp.lt.s32.totalorder %s12, 1
          %s139 = scalar_select %p138, %s12, 1
          %s140 = smul.addr %s139, 8
          %s141 = scalar_lea.vmem %s0, %s140
        $region20: #{tpu_custom_call.1} parent=15 // pred_fallthru
          _
        // Predicated region
        $region21: #{tpu_custom_call.1} parent=15 // pred_check
          %p142 = pneg %p58
        $region22: #{tpu_custom_call.1} parent=15 // pred_check_branch
          %144 = sbr.rel (%p142) target = $region24
        $region23: #{tpu_custom_call.1} parent=15 // pred_region
          %p145 = scmp.lt.s32.totalorder %s12, 1
          %s146 = scalar_select %p145, %s12, 1
          %s147 = smul.addr %s146, 8
          %s148 = scalar_lea.vmem %s1, %s147
        $region24: #{tpu_custom_call.1} parent=15 // pred_fallthru
          _
        // Predicated region
        $region25: #{tpu_custom_call.1} parent=15 // pred_check
          %p149 = pneg %p84
        $region26: #{tpu_custom_call.1} parent=15 // pred_check_branch
          %151 = sbr.rel (%p149) target = $region28
        $region27: #{tpu_custom_call.1} parent=15 // pred_region
          %p152 = scmp.lt.s32.totalorder %s12, 1
          %s153 = scalar_select %p152, %s12, 1
          %s154 = smul.addr %s153, 8
          %s155 = scalar_lea.vmem %s2, %s154
        $region28: #{tpu_custom_call.1} parent=15 // pred_fallthru
          _
      $region16: #{tpu_custom_call.1} parent=5 // pred_fallthru
        _
      %p156 = scmp.le.s32.totalorder 1, %s12
      %p157 = scmp.lt.s32.totalorder %s12, 3
      %p158 = pnand %p156, %p157
      %p159 = pneg %p158
      // Predicated region
      $region29: #{tpu_custom_call.1} parent=5 // pred_check
        _
      $region30: #{tpu_custom_call.1} parent=5 // pred_check_branch
        %161 = sbr.rel (%p158) target = $region32
      $region31: #{tpu_custom_call.1} parent=5 // pred_region
        %s162 = ssub.s32 %s12, 1
        %p163 = scmp.lt.s32.totalorder %s17, 1
        %s164 = scalar_select %p163, %s17, 1
        %s165 = smul.addr %s164, 8
        %s166 = scalar_lea.vmem %s0, %s165
        %p167 = pneg %p38
        %p168 = pneg %p35
        %p169 = scmp.lt.s32.totalorder %s17, 1
        %s170 = scalar_select %p169, %s17, 1
        %s171 = smul.addr %s170, 8
        %s172 = scalar_lea.vmem %s1, %s171
        %p173 = pneg %p64
        %p174 = pneg %p61
        %p175 = scmp.lt.s32.totalorder %s17, 1
        %s176 = scalar_select %p175, %s17, 1
        %s177 = smul.addr %s176, 8
        %s178 = scalar_lea.vmem %s2, %s177
        %p179 = pneg %p90
        %p180 = pneg %p87
        %p181 = pneg %p116
        %p182 = pneg %p113
        %s183 = sand.u32 %s103, 1
        %s184 = scalar_lea.sflag [#allocation3], %s183
        %s185 = sand.u32 %s103, 1
        %s186 = scalar_lea.vmem [#allocation2], %s185
        %p187 = scmp.lt.s32.totalorder %s17, 1
        %s188 = scalar_select %p187, %s17, 1
        %s189 = smul.addr %s188, 8
        %s190 = scalar_lea.vmem %s0, %s189
        %p191 = scmp.lt.s32.totalorder %s17, 1
        %s192 = scalar_select %p191, %s17, 1
        %s193 = smul.addr %s192, 8
        %s194 = scalar_lea.vmem %s1, %s193
        %p195 = scmp.lt.s32.totalorder %s17, 1
        %s196 = scalar_select %p195, %s17, 1
        %s197 = smul.addr %s196, 8
        %s198 = scalar_lea.vmem %s2, %s197
        %s199 = smul.u32 %s17, 8
        %v200 = vlaneseq
        %v201 = vshrl.u32 %v200, 7
        %v202 = vstv %s199
        %v203 = vadd.s32 %v202, %v201
        %vm204 = vcmp.lt.s32.totalorder %v203, 16
        %v205 = vld [vmem:[%s190] sm:$0xff]
        %v206 = vsel %vm204, 1, 0
        %vm207 = vcmp.eq.s32.totalorder %v206, 1
        %v208 = vsel %vm207, %v205, -1e+09
        %v209 = vld [vmem:[%s194] sm:$0xff]
        %v210 = vld [vmem:[%s198] sm:$0xff]
        %v211 = vsel %vm204, %v210, 0.0
        %v212 = vlaneseq
        %v213 = vand.u32 %v212, 127
        %214 = vset.pattern.permute.xlu0 0
        %215 = vperm.xlu0 %214, %v209
        %v216 = vpop.permute.xlu0 %215
        %vm217 = vcmp.eq.s32.totalorder %v213, %v216
        %v218 = vsel %vm217, 0.91, 0.01
        %vm219 = vcmask 80896
        %v220 = vsel %vm219, %v208, -inf
        %221 = vmax.xlane.f32.xlu0 %v220
        %v222 = vpop.xlane.xlu0 %221
        %v223 = vsub.f32 %v208, %v222
        %v224 = vmul.f32 %v223, 1.442695
        %v225 = vpow.pop %v224
        %v226 = vsel %vm219, %v225, 0.0
        %227 = vadd.xlane.f32.xlu0 %v226
        %v228 = vpop.xlane.xlu0 %227
        %v229 = vlog2.pop %v228
        %v230 = vmul.f32 %v229, 0.6931472
        %v231 = vsub.f32 %v223, %v230
        %v232 = vmax.f32 %v231, -100.0
        %v233 = vsub.f32 %v228, %v225
        %v234 = vlog2.pop %v233
        %v235 = vmul.f32 %v234, 0.6931472
        %v236 = vsub.f32 %v235, %v230
        %v237 = vmax.f32 %v236, -100.0
        %v238 = vmul.f32 %v218, %v232
        %v239 = vsub.f32 1.0, %v218
        %v240 = vmul.f32 %v239, %v237
        %v241 = vadd.f32 %v238, %v240
        %v242 = vsub.f32 0.0, %v241
        %244 = vset.pattern.permute.xlu0 0
        %245 = vperm.xlu0 %244, %v211
        %v246 = vpop.permute.xlu0 %245
        %v248 = vmul.f32 %v246, %v242
        %v249 = vsel %vm219, %v248, 0.0
        %v250 = vrot.slane %v249, 4
        %v251 = vadd.f32 %v249, %v250
        %v252 = vrot.slane %v251, 2
        %v253 = vadd.f32 %v251, %v252
        %v254 = vrot.slane %v253, 1
        %v255 = vadd.f32 %v253, %v254
        %vm256 = vcmask 73728
        %257 = vst.msk [vmem:[%s186] sm:$0x1] %vm256, %v255
        %s258 = sand.u32 %s103, 1
        %s259 = scalar_lea.sflag [#allocation3], %s258
        %s260 = sand.u32 %s103, 1
        %s261 = scalar_lea.vmem [#allocation2], %s260
        // Predicated region
        $region33: #{tpu_custom_call.1} parent=31 // pred_check
          %p262 = pneg %p113
        $region34: #{tpu_custom_call.1} parent=31 // pred_check_branch
          %264 = sbr.rel (%p262) target = $region36
        $region35: #{tpu_custom_call.1} parent=31 // pred_region
          %s266 = ssub.s32 16, 16
          %267 = vsyncadd %s259, %s266
          %s268 = smul.addr %s17, 16
          %s269 = scalar_lea.hbm %s3, %s268
          %s271 = sshll.u32 %s261, 4
          %s272 = int_to_ptr.vmem [resolvable:$true] %s271
          %274 = dma.vmem_to_hbm [thread:$0]  %s272, 16, %s269, %s259
        $region36: #{tpu_custom_call.1} parent=31 // pred_fallthru
          _
      $region32: #{tpu_custom_call.1} parent=5 // pred_fallthru
        _
      %p275 = scmp.le.s32.totalorder 2, %s12
      // Predicated region
      $region37: #{tpu_custom_call.1} parent=5 // pred_check
        %p276 = pneg %p275
      $region38: #{tpu_custom_call.1} parent=5 // pred_check_branch
        %278 = sbr.rel (%p276) target = $region40
      $region39: #{tpu_custom_call.1} parent=5 // pred_region
        %s279 = ssub.s32 %s12, 2
        // Predicated region
        $region41: #{tpu_custom_call.1} parent=39 // pred_check
          %p280 = pneg %p119
        $region42: #{tpu_custom_call.1} parent=39 // pred_check_branch
          %282 = sbr.rel (%p280) target = $region44
        $region43: #{tpu_custom_call.1} parent=39 // pred_region
          %s283 = sand.u32 %s104, 1
          %s284 = scalar_lea.sflag [#allocation3], %s283
          %s285 = sand.u32 %s104, 1
          %s286 = scalar_lea.vmem [#allocation2], %s285
          %287 = dma.done %s284, 16
        $region44: #{tpu_custom_call.1} parent=39 // pred_fallthru
          _
      $region40: #{tpu_custom_call.1} parent=5 // pred_fallthru
        _
    $region6: #{tpu_custom_call.1} parent=1 // loop_footer
      %s16 = sadd.s32 1, %s12
    $region7: #{tpu_custom_call.1} parent=1 // loop_footer_branch
      %11 = sbr.rel target = $region3
    $region8: #{tpu_custom_call.1} parent=1 // loop_exit
      _
    %288 = vsyncpa [#allocation3], 1
    %s289 = scalar_lea.sflag [#allocation3], 1
    %290 = vsyncpa %s289, 1

</llo_original>
